<compile_context>
chip_gen: v7x
topology: tpu7x:2x2x1
jax: 0.10.0
libtpu: 0.0.40
codegen_flags: <defaults>
</compile_context>

<pallas_src>
import functools

import jax
import jax.numpy as jnp
from jax.experimental import pallas as pl
from jax.experimental.pallas import tpu as pltpu


def _round_up(x, m):
    return ((x + m - 1) // m) * m


def _default_target_block_bytes():
    # ~2 MiB per input block hides per-step overhead at v7x HBM BW while fitting
    # its 64 MiB VMEM; v5e/v6e (128 MiB VMEM) can take ~4 MiB blocks.
    try:
        vmem = pltpu.get_tpu_info().vmem_capacity_bytes
        return (2 << 20) if vmem <= (64 << 20) else (4 << 20)
    except Exception:
        return 2 << 20


# ---------------------------------------------------------------------------
# Path A: C <= 8 and HW % 128 == 0.
# x viewed as (N, C, R, 128) with R = HW // 128 so the last two block dims are
# full (8,128)-friendly tiles even for tiny C.  Weight/bias live in SMEM and
# are broadcast as scalars into a VPU FMA loop.
# ---------------------------------------------------------------------------
def _small_c_kernel(x_ref, w_ref, b_ref, o_ref, *, C):
    # x_ref: (Nb, C, tile_rows, 128) VMEM block
    # w_ref: (C, C) in SMEM (scalar reads), b_ref: (C,) in SMEM
    x = x_ref[...].astype(jnp.float32)
    outs = []
    for o in range(C):
        acc = x[:, o] + b_ref[o]                 # residual + bias
        for c in range(C):
            acc = acc + w_ref[o, c] * x[:, c]    # scalar-broadcast FMA
        outs.append(acc)
    o_ref[...] = jnp.stack(outs, axis=1).astype(o_ref.dtype)


def _residual_small_c(x_nchw, weight, bias, target_block_bytes):
    N, C, H, W = x_nchw.shape
    HW = H * W
    R = HW // 128
    itemsize = x_nchw.dtype.itemsize

    x4 = x_nchw.reshape(N, C, R, 128)            # metadata-only reshape

    # Rows (of 128 lanes, across all C channels) per block, sized by bytes.
    row_group_bytes = C * 128 * itemsize
    rows_target = max(8, target_block_bytes // row_group_bytes)
    if rows_target >= R:
        tile_rows = R                            # full extent (ok even if R % 8 != 0)
    else:
        tile_rows = (rows_target // 8) * 8

    # Fold several batch samples into one block when a sample is small.
    nb = 1
    if tile_rows == R:
        per_sample_bytes = C * R * 128 * itemsize
        nb = int(min(N, max(1, target_block_bytes // per_sample_bytes)))
        while N % nb:
            nb -= 1
        # Keep >= 2 grid steps when possible so both v7x TensorCores get work.
        if nb == N and N > 1:
            nb = N // 2
            while N % nb:
                nb -= 1
    grid_n = N // nb
    grid_r = pl.cdiv(R, tile_rows) if tile_rows < R else 1

    block_in_bytes = nb * C * tile_rows * 128 * itemsize
    block_f32_bytes = nb * C * tile_rows * 128 * 4
    vmem_est = 4 * block_in_bytes + 3 * block_f32_bytes + (1 << 20)
    vmem_limit = int(min(64 << 20, max(32 << 20, 2 * vmem_est)))

    kernel = functools.partial(_small_c_kernel, C=C)

    out4 = pl.pallas_call(
        kernel,
        out_shape=jax.ShapeDtypeStruct((N, C, R, 128), x_nchw.dtype),
        grid_spec=pltpu.PrefetchScalarGridSpec(
            num_scalar_prefetch=0,
            grid=(grid_n, grid_r),
            in_specs=[
                pl.BlockSpec((nb, C, tile_rows, 128), lambda n, r: (n, 0, r, 0)),
                pl.BlockSpec(memory_space=pltpu.MemorySpace.SMEM),
                pl.BlockSpec(memory_space=pltpu.MemorySpace.SMEM),
            ],
            out_specs=pl.BlockSpec((nb, C, tile_rows, 128),
                                   lambda n, r: (n, 0, r, 0)),
        ),
        compiler_params=pltpu.CompilerParams(
            dimension_semantics=("parallel", "parallel"),
            vmem_limit_bytes=vmem_limit,
        ),
    )(x4, weight, bias)

    return out4.reshape(N, C, H, W)


# ---------------------------------------------------------------------------
# Path B: general case — x viewed as (N, C, HW), block (1, C, tile_hw).
# C >= 16 uses the MXU (native-dtype operands, f32 accumulation); smaller C
# (only reached when HW % 128 != 0) falls back to an unrolled VPU mix.
# ---------------------------------------------------------------------------
def _mix_mxu_kernel(x_ref, w_ref, b_ref, o_ref):
    x = x_ref[0]                                               # (C, T), native dtype
    y = jnp.dot(w_ref[...], x, preferred_element_type=jnp.float32)
    out = x.astype(jnp.float32) + b_ref[...].astype(jnp.float32) + y
    o_ref[0] = out.astype(o_ref.dtype)


def _mix_vpu_flat_kernel(x_ref, w_ref, b_ref, o_ref, *, C):
    x = x_ref[0].astype(jnp.float32)                           # (C, T)
    w = w_ref[...].astype(jnp.float32)
    acc = x + b_ref[...].astype(jnp.float32)
    for c in range(C):
        acc = acc + w[:, c:c + 1] * x[c:c + 1, :]
    o_ref[0] = acc.astype(o_ref.dtype)


def _residual_general(x_nchw, weight, bias, target_block_bytes):
    N, C, H, W = x_nchw.shape
    HW = H * W
    itemsize = x_nchw.dtype.itemsize

    x3 = x_nchw.reshape(N, C, HW)                # metadata-only reshape

    tile_hw = max(128, (target_block_bytes // (C * itemsize)) // 128 * 128)
    if tile_hw >= HW:
        tile_hw = HW                             # full extent (ok even if HW % 128 != 0)
        grid_hw = 1
    else:
        grid_hw = pl.cdiv(HW, tile_hw)           # ragged tail handled by Pallas

    use_mxu = C >= 16
    kernel = (_mix_mxu_kernel if use_mxu
              else functools.partial(_mix_vpu_flat_kernel, C=C))

    b2 = bias.reshape(C, 1)

    block_bytes = C * tile_hw * itemsize
    w_bytes = C * C * weight.dtype.itemsize
    vmem_est = 4 * block_bytes + 2 * C * tile_hw * 4 + 2 * w_bytes + (1 << 20)
    vmem_limit = int(min(64 << 20, max(32 << 20, 2 * vmem_est)))

    out3 = pl.pallas_call(
        kernel,
        out_shape=jax.ShapeDtypeStruct((N, C, HW), x_nchw.dtype),
        grid_spec=pltpu.PrefetchScalarGridSpec(
            num_scalar_prefetch=0,
            grid=(N, grid_hw),
            in_specs=[
                pl.BlockSpec((1, C, tile_hw), lambda n, t: (n, 0, t)),
                pl.BlockSpec((C, C), lambda n, t: (0, 0)),
                pl.BlockSpec((C, 1), lambda n, t: (0, 0)),
            ],
            out_specs=pl.BlockSpec((1, C, tile_hw), lambda n, t: (n, 0, t)),
        ),
        compiler_params=pltpu.CompilerParams(
            dimension_semantics=("parallel", "parallel"),
            vmem_limit_bytes=vmem_limit,
        ),
    )(x3, weight, b2)

    return out3.reshape(N, C, H, W)


def residual_forward(x_nchw, weight, bias, *, target_block_bytes=None):
    """out = x + conv1x1(x), fused in one Pallas kernel (native NCHW layout).

    x_nchw : (N, C, H, W)
    weight : (C_out, C_in)  (squeezed 1x1 conv weight)
    bias   : (C_out,)
    """
    N, C, H, W = x_nchw.shape
    HW = H * W
    if target_block_bytes is None:
        target_block_bytes = _default_target_block_bytes()

    if C <= 8 and HW % 128 == 0:
        return _residual_small_c(x_nchw, weight, bias, target_block_bytes)
    return _residual_general(x_nchw, weight, bias, target_block_bytes)


if __name__ == "__main__":
    key = jax.random.PRNGKey(0)

    def reference(x, w, b):
        C = x.shape[1]
        y = jnp.einsum("nchw,oc->nohw", x, w,
                       precision=jax.lax.Precision.HIGHEST)
        return x + y + b.reshape(1, C, 1, 1)

    configs = [
        # (N, C, H, W, tol) — exercises all three code paths
        (2, 4, 16, 16, 1e-5),    # small-C 4D path (C<=8, HW % 128 == 0)
        (2, 4, 7, 7, 1e-5),      # general path, VPU fallback (HW % 128 != 0)
        (2, 32, 10, 10, 5e-3),   # general path, MXU (C >= 16)
    ]
    for (N, C, H, W, tol) in configs:
        k_x, k_w, k_b, key = jax.random.split(key, 4)
        x = jax.random.normal(k_x, (N, C, H, W), dtype=jnp.float32)
        w = jax.random.normal(k_w, (C, C), dtype=jnp.float32) * 0.1
        b = jax.random.normal(k_b, (C,), dtype=jnp.float32) * 0.1

        out = jax.block_until_ready(residual_forward(x, w, b))
        ref = reference(x, w, b)
        assert out.shape == (N, C, H, W)
        assert jnp.allclose(out, ref, atol=tol, rtol=tol), (
            f"mismatch for shape {(N, C, H, W)}: "
            f"max err {jnp.max(jnp.abs(out - ref))}")

    print("KERNEL_OK")
</pallas_src>

<mosaic_0001>
module attributes {stable_mosaic.version = 11 : i64} {
  func.func @_small_c_kernel(%arg0: i32, %arg1: i32, %arg2: memref<1x4x2x128xf32, #tpu.memory_space<vmem>>, %arg3: memref<4x4xf32, #tpu.memory_space<smem>>, %arg4: memref<4xf32, #tpu.memory_space<smem>>, %arg5: memref<1x4x2x128xf32, #tpu.memory_space<vmem>>) attributes {dimension_semantics = [#tpu.dimension_semantics<parallel>, #tpu.dimension_semantics<parallel>], iteration_bounds = array<i64: 2, 1>, scalar_prefetch = 0 : i64, scratch_operands = 0 : i64, tpu.core_type = #tpu.core_type<tc>, window_params = [{transform_indices = @transform_0, window_bounds = array<i64: 1, 4, 2, 128>}, {transform_indices = @transform_1, window_bounds = array<i64: 4, 4>}, {transform_indices = @transform_2, window_bounds = array<i64: 4>}, {transform_indices = @transform_3, window_bounds = array<i64: 1, 4, 2, 128>}]} {
    %c0 = arith.constant 0 : index
    %c0_0 = arith.constant 0 : index
    %c0_1 = arith.constant 0 : index
    %c0_2 = arith.constant 0 : index
    %0 = vector.load %arg2[%c0, %c0_0, %c0_1, %c0_2] : memref<1x4x2x128xf32, #tpu.memory_space<vmem>>, vector<1x4x2x128xf32>
    %1 = vector.extract_strided_slice %0 {offsets = [0, 0, 0, 0], sizes = [1, 1, 2, 128], strides = [1, 1, 1, 1]} : vector<1x4x2x128xf32> to vector<1x1x2x128xf32>
    %2 = vector.shape_cast %1 : vector<1x1x2x128xf32> to vector<1x2x128xf32>
    %c0_3 = arith.constant 0 : index
    %3 = memref.load %arg4[%c0_3] : memref<4xf32, #tpu.memory_space<smem>>
    %4 = vector.broadcast %3 : f32 to vector<1x2x128xf32>
    %5 = arith.addf %2, %4 : vector<1x2x128xf32>
    %c0_4 = arith.constant 0 : index
    %c0_5 = arith.constant 0 : index
    %6 = memref.load %arg3[%c0_4, %c0_5] : memref<4x4xf32, #tpu.memory_space<smem>>
    %7 = vector.extract_strided_slice %0 {offsets = [0, 0, 0, 0], sizes = [1, 1, 2, 128], strides = [1, 1, 1, 1]} : vector<1x4x2x128xf32> to vector<1x1x2x128xf32>
    %8 = vector.shape_cast %7 : vector<1x1x2x128xf32> to vector<1x2x128xf32>
    %9 = vector.broadcast %6 : f32 to vector<1x2x128xf32>
    %10 = arith.mulf %9, %8 : vector<1x2x128xf32>
    %11 = arith.addf %5, %10 : vector<1x2x128xf32>
    %c0_6 = arith.constant 0 : index
    %c1 = arith.constant 1 : index
    %12 = memref.load %arg3[%c0_6, %c1] : memref<4x4xf32, #tpu.memory_space<smem>>
    %13 = vector.extract_strided_slice %0 {offsets = [0, 1, 0, 0], sizes = [1, 1, 2, 128], strides = [1, 1, 1, 1]} : vector<1x4x2x128xf32> to vector<1x1x2x128xf32>
    %14 = vector.shape_cast %13 : vector<1x1x2x128xf32> to vector<1x2x128xf32>
    %15 = vector.broadcast %12 : f32 to vector<1x2x128xf32>
    %16 = arith.mulf %15, %14 : vector<1x2x128xf32>
    %17 = arith.addf %11, %16 : vector<1x2x128xf32>
    %c0_7 = arith.constant 0 : index
    %c2 = arith.constant 2 : index
    %18 = memref.load %arg3[%c0_7, %c2] : memref<4x4xf32, #tpu.memory_space<smem>>
    %19 = vector.extract_strided_slice %0 {offsets = [0, 2, 0, 0], sizes = [1, 1, 2, 128], strides = [1, 1, 1, 1]} : vector<1x4x2x128xf32> to vector<1x1x2x128xf32>
    %20 = vector.shape_cast %19 : vector<1x1x2x128xf32> to vector<1x2x128xf32>
    %21 = vector.broadcast %18 : f32 to vector<1x2x128xf32>
    %22 = arith.mulf %21, %20 : vector<1x2x128xf32>
    %23 = arith.addf %17, %22 : vector<1x2x128xf32>
    %c0_8 = arith.constant 0 : index
    %c3 = arith.constant 3 : index
    %24 = memref.load %arg3[%c0_8, %c3] : memref<4x4xf32, #tpu.memory_space<smem>>
    %25 = vector.extract_strided_slice %0 {offsets = [0, 3, 0, 0], sizes = [1, 1, 2, 128], strides = [1, 1, 1, 1]} : vector<1x4x2x128xf32> to vector<1x1x2x128xf32>
    %26 = vector.shape_cast %25 : vector<1x1x2x128xf32> to vector<1x2x128xf32>
    %27 = vector.broadcast %24 : f32 to vector<1x2x128xf32>
    %28 = arith.mulf %27, %26 : vector<1x2x128xf32>
    %29 = arith.addf %23, %28 : vector<1x2x128xf32>
    %30 = vector.extract_strided_slice %0 {offsets = [0, 1, 0, 0], sizes = [1, 1, 2, 128], strides = [1, 1, 1, 1]} : vector<1x4x2x128xf32> to vector<1x1x2x128xf32>
    %31 = vector.shape_cast %30 : vector<1x1x2x128xf32> to vector<1x2x128xf32>
    %c1_9 = arith.constant 1 : index
    %32 = memref.load %arg4[%c1_9] : memref<4xf32, #tpu.memory_space<smem>>
    %33 = vector.broadcast %32 : f32 to vector<1x2x128xf32>
    %34 = arith.addf %31, %33 : vector<1x2x128xf32>
    %c1_10 = arith.constant 1 : index
    %c0_11 = arith.constant 0 : index
    %35 = memref.load %arg3[%c1_10, %c0_11] : memref<4x4xf32, #tpu.memory_space<smem>>
    %36 = vector.extract_strided_slice %0 {offsets = [0, 0, 0, 0], sizes = [1, 1, 2, 128], strides = [1, 1, 1, 1]} : vector<1x4x2x128xf32> to vector<1x1x2x128xf32>
    %37 = vector.shape_cast %36 : vector<1x1x2x128xf32> to vector<1x2x128xf32>
    %38 = vector.broadcast %35 : f32 to vector<1x2x128xf32>
    %39 = arith.mulf %38, %37 : vector<1x2x128xf32>
    %40 = arith.addf %34, %39 : vector<1x2x128xf32>
    %c1_12 = arith.constant 1 : index
    %c1_13 = arith.constant 1 : index
    %41 = memref.load %arg3[%c1_12, %c1_13] : memref<4x4xf32, #tpu.memory_space<smem>>
    %42 = vector.extract_strided_slice %0 {offsets = [0, 1, 0, 0], sizes = [1, 1, 2, 128], strides = [1, 1, 1, 1]} : vector<1x4x2x128xf32> to vector<1x1x2x128xf32>
    %43 = vector.shape_cast %42 : vector<1x1x2x128xf32> to vector<1x2x128xf32>
    %44 = vector.broadcast %41 : f32 to vector<1x2x128xf32>
    %45 = arith.mulf %44, %43 : vector<1x2x128xf32>
    %46 = arith.addf %40, %45 : vector<1x2x128xf32>
    %c1_14 = arith.constant 1 : index
    %c2_15 = arith.constant 2 : index
    %47 = memref.load %arg3[%c1_14, %c2_15] : memref<4x4xf32, #tpu.memory_space<smem>>
    %48 = vector.extract_strided_slice %0 {offsets = [0, 2, 0, 0], sizes = [1, 1, 2, 128], strides = [1, 1, 1, 1]} : vector<1x4x2x128xf32> to vector<1x1x2x128xf32>
    %49 = vector.shape_cast %48 : vector<1x1x2x128xf32> to vector<1x2x128xf32>
    %50 = vector.broadcast %47 : f32 to vector<1x2x128xf32>
    %51 = arith.mulf %50, %49 : vector<1x2x128xf32>
    %52 = arith.addf %46, %51 : vector<1x2x128xf32>
    %c1_16 = arith.constant 1 : index
    %c3_17 = arith.constant 3 : index
    %53 = memref.load %arg3[%c1_16, %c3_17] : memref<4x4xf32, #tpu.memory_space<smem>>
    %54 = vector.extract_strided_slice %0 {offsets = [0, 3, 0, 0], sizes = [1, 1, 2, 128], strides = [1, 1, 1, 1]} : vector<1x4x2x128xf32> to vector<1x1x2x128xf32>
    %55 = vector.shape_cast %54 : vector<1x1x2x128xf32> to vector<1x2x128xf32>
    %56 = vector.broadcast %53 : f32 to vector<1x2x128xf32>
    %57 = arith.mulf %56, %55 : vector<1x2x128xf32>
    %58 = arith.addf %52, %57 : vector<1x2x128xf32>
    %59 = vector.extract_strided_slice %0 {offsets = [0, 2, 0, 0], sizes = [1, 1, 2, 128], strides = [1, 1, 1, 1]} : vector<1x4x2x128xf32> to vector<1x1x2x128xf32>
    %60 = vector.shape_cast %59 : vector<1x1x2x128xf32> to vector<1x2x128xf32>
    %c2_18 = arith.constant 2 : index
    %61 = memref.load %arg4[%c2_18] : memref<4xf32, #tpu.memory_space<smem>>
    %62 = vector.broadcast %61 : f32 to vector<1x2x128xf32>
    %63 = arith.addf %60, %62 : vector<1x2x128xf32>
    %c2_19 = arith.constant 2 : index
    %c0_20 = arith.constant 0 : index
    %64 = memref.load %arg3[%c2_19, %c0_20] : memref<4x4xf32, #tpu.memory_space<smem>>
    %65 = vector.extract_strided_slice %0 {offsets = [0, 0, 0, 0], sizes = [1, 1, 2, 128], strides = [1, 1, 1, 1]} : vector<1x4x2x128xf32> to vector<1x1x2x128xf32>
    %66 = vector.shape_cast %65 : vector<1x1x2x128xf32> to vector<1x2x128xf32>
    %67 = vector.broadcast %64 : f32 to vector<1x2x128xf32>
    %68 = arith.mulf %67, %66 : vector<1x2x128xf32>
    %69 = arith.addf %63, %68 : vector<1x2x128xf32>
    %c2_21 = arith.constant 2 : index
    %c1_22 = arith.constant 1 : index
    %70 = memref.load %arg3[%c2_21, %c1_22] : memref<4x4xf32, #tpu.memory_space<smem>>
    %71 = vector.extract_strided_slice %0 {offsets = [0, 1, 0, 0], sizes = [1, 1, 2, 128], strides = [1, 1, 1, 1]} : vector<1x4x2x128xf32> to vector<1x1x2x128xf32>
    %72 = vector.shape_cast %71 : vector<1x1x2x128xf32> to vector<1x2x128xf32>
    %73 = vector.broadcast %70 : f32 to vector<1x2x128xf32>
    %74 = arith.mulf %73, %72 : vector<1x2x128xf32>
    %75 = arith.addf %69, %74 : vector<1x2x128xf32>
    %c2_23 = arith.constant 2 : index
    %c2_24 = arith.constant 2 : index
    %76 = memref.load %arg3[%c2_23, %c2_24] : memref<4x4xf32, #tpu.memory_space<smem>>
    %77 = vector.extract_strided_slice %0 {offsets = [0, 2, 0, 0], sizes = [1, 1, 2, 128], strides = [1, 1, 1, 1]} : vector<1x4x2x128xf32> to vector<1x1x2x128xf32>
    %78 = vector.shape_cast %77 : vector<1x1x2x128xf32> to vector<1x2x128xf32>
    %79 = vector.broadcast %76 : f32 to vector<1x2x128xf32>
    %80 = arith.mulf %79, %78 : vector<1x2x128xf32>
    %81 = arith.addf %75, %80 : vector<1x2x128xf32>
    %c2_25 = arith.constant 2 : index
    %c3_26 = arith.constant 3 : index
    %82 = memref.load %arg3[%c2_25, %c3_26] : memref<4x4xf32, #tpu.memory_space<smem>>
    %83 = vector.extract_strided_slice %0 {offsets = [0, 3, 0, 0], sizes = [1, 1, 2, 128], strides = [1, 1, 1, 1]} : vector<1x4x2x128xf32> to vector<1x1x2x128xf32>
    %84 = vector.shape_cast %83 : vector<1x1x2x128xf32> to vector<1x2x128xf32>
    %85 = vector.broadcast %82 : f32 to vector<1x2x128xf32>
    %86 = arith.mulf %85, %84 : vector<1x2x128xf32>
    %87 = arith.addf %81, %86 : vector<1x2x128xf32>
    %88 = vector.extract_strided_slice %0 {offsets = [0, 3, 0, 0], sizes = [1, 1, 2, 128], strides = [1, 1, 1, 1]} : vector<1x4x2x128xf32> to vector<1x1x2x128xf32>
    %89 = vector.shape_cast %88 : vector<1x1x2x128xf32> to vector<1x2x128xf32>
    %c3_27 = arith.constant 3 : index
    %90 = memref.load %arg4[%c3_27] : memref<4xf32, #tpu.memory_space<smem>>
    %91 = vector.broadcast %90 : f32 to vector<1x2x128xf32>
    %92 = arith.addf %89, %91 : vector<1x2x128xf32>
    %c3_28 = arith.constant 3 : index
    %c0_29 = arith.constant 0 : index
    %93 = memref.load %arg3[%c3_28, %c0_29] : memref<4x4xf32, #tpu.memory_space<smem>>
    %94 = vector.extract_strided_slice %0 {offsets = [0, 0, 0, 0], sizes = [1, 1, 2, 128], strides = [1, 1, 1, 1]} : vector<1x4x2x128xf32> to vector<1x1x2x128xf32>
    %95 = vector.shape_cast %94 : vector<1x1x2x128xf32> to vector<1x2x128xf32>
    %96 = vector.broadcast %93 : f32 to vector<1x2x128xf32>
    %97 = arith.mulf %96, %95 : vector<1x2x128xf32>
    %98 = arith.addf %92, %97 : vector<1x2x128xf32>
    %c3_30 = arith.constant 3 : index
    %c1_31 = arith.constant 1 : index
    %99 = memref.load %arg3[%c3_30, %c1_31] : memref<4x4xf32, #tpu.memory_space<smem>>
    %100 = vector.extract_strided_slice %0 {offsets = [0, 1, 0, 0], sizes = [1, 1, 2, 128], strides = [1, 1, 1, 1]} : vector<1x4x2x128xf32> to vector<1x1x2x128xf32>
    %101 = vector.shape_cast %100 : vector<1x1x2x128xf32> to vector<1x2x128xf32>
    %102 = vector.broadcast %99 : f32 to vector<1x2x128xf32>
    %103 = arith.mulf %102, %101 : vector<1x2x128xf32>
    %104 = arith.addf %98, %103 : vector<1x2x128xf32>
    %c3_32 = arith.constant 3 : index
    %c2_33 = arith.constant 2 : index
    %105 = memref.load %arg3[%c3_32, %c2_33] : memref<4x4xf32, #tpu.memory_space<smem>>
    %106 = vector.extract_strided_slice %0 {offsets = [0, 2, 0, 0], sizes = [1, 1, 2, 128], strides = [1, 1, 1, 1]} : vector<1x4x2x128xf32> to vector<1x1x2x128xf32>
    %107 = vector.shape_cast %106 : vector<1x1x2x128xf32> to vector<1x2x128xf32>
    %108 = vector.broadcast %105 : f32 to vector<1x2x128xf32>
    %109 = arith.mulf %108, %107 : vector<1x2x128xf32>
    %110 = arith.addf %104, %109 : vector<1x2x128xf32>
    %c3_34 = arith.constant 3 : index
    %c3_35 = arith.constant 3 : index
    %111 = memref.load %arg3[%c3_34, %c3_35] : memref<4x4xf32, #tpu.memory_space<smem>>
    %112 = vector.extract_strided_slice %0 {offsets = [0, 3, 0, 0], sizes = [1, 1, 2, 128], strides = [1, 1, 1, 1]} : vector<1x4x2x128xf32> to vector<1x1x2x128xf32>
    %113 = vector.shape_cast %112 : vector<1x1x2x128xf32> to vector<1x2x128xf32>
    %114 = vector.broadcast %111 : f32 to vector<1x2x128xf32>
    %115 = arith.mulf %114, %113 : vector<1x2x128xf32>
    %116 = arith.addf %110, %115 : vector<1x2x128xf32>
    %117 = vector.shape_cast %29 : vector<1x2x128xf32> to vector<1x1x2x128xf32>
    %118 = vector.shape_cast %58 : vector<1x2x128xf32> to vector<1x1x2x128xf32>
    %119 = vector.shape_cast %87 : vector<1x2x128xf32> to vector<1x1x2x128xf32>
    %120 = vector.shape_cast %116 : vector<1x2x128xf32> to vector<1x1x2x128xf32>
    %121 = tpu.concatenate %117, %118, %119, %120 in 1 : vector<1x1x2x128xf32>, vector<1x1x2x128xf32>, vector<1x1x2x128xf32>, vector<1x1x2x128xf32> -> vector<1x4x2x128xf32>
    %c0_36 = arith.constant 0 : index
    %c0_37 = arith.constant 0 : index
    %c0_38 = arith.constant 0 : index
    %c0_39 = arith.constant 0 : index
    %122 = vector.load %arg5[%c0_36, %c0_37, %c0_38, %c0_39] : memref<1x4x2x128xf32, #tpu.memory_space<vmem>>, vector<1x4x2x128xf32>
    tpu.vector_store %arg5[%c0_36, %c0_37, %c0_38, %c0_39], %121 {strides = array<i32>} : memref<1x4x2x128xf32, #tpu.memory_space<vmem>>, vector<1x4x2x128xf32>,
    return
  }
  func.func @transform_0(%arg0: i32, %arg1: i32) -> (i32, i32, i32, i32) {
    %c0_i32 = arith.constant 0 : i32
    %c0_i32_0 = arith.constant 0 : i32
    %c0_i32_1 = arith.constant 0 : i32
    return %arg0, %c0_i32, %arg1, %c0_i32_0 : i32, i32, i32, i32
  }
  func.func @transform_1(%arg0: i32, %arg1: i32) -> (i32, i32) {
    %c0_i32 = arith.constant 0 : i32
    %c0_i32_0 = arith.constant 0 : i32
    %c0_i32_1 = arith.constant 0 : i32
    return %c0_i32, %c0_i32_0 : i32, i32
  }
  func.func @transform_2(%arg0: i32, %arg1: i32) -> i32 {
    %c0_i32 = arith.constant 0 : i32
    %c0_i32_0 = arith.constant 0 : i32
    return %c0_i32 : i32
  }
  func.func @transform_3(%arg0: i32, %arg1: i32) -> (i32, i32, i32, i32) {
    %c0_i32 = arith.constant 0 : i32
    %c0_i32_0 = arith.constant 0 : i32
    %c0_i32_1 = arith.constant 0 : i32
    return %arg0, %c0_i32, %arg1, %c0_i32_0 : i32, i32, i32, i32
  }
}

</mosaic_0001>

<llo_original>
// kernel: tpu_custom_call.1
$region0: #{tpu_custom_call.1}
  #allocation0 [shape = 'u32[]', space=smem, size = 0x4, offset = 0x4, fixed_abs, tag = 'smem constant byte address 0x4 - core index']
  #allocation1 [shape = 'u32[144,128]{1,0:T(1,128)}', space=vmem, size = 0x12000, scoped, tag = 'internal scratch']
  %s0 = inlined_call_operand.hbm [shape: f32[2,4,2,128], index: 0, kind: input, shape index: {}]
  %s1 = inlined_call_operand.hbm [shape: f32[4,4], index: 1, kind: input, shape index: {}]
  %s2 = inlined_call_operand.vmem [shape: f32[4], index: 2, kind: input, shape index: {}]
  %s3 = inlined_call_operand.hbm [shape: f32[2,4,2,128], index: 3, kind: output, shape index: {}]
  %s4 = sld [smem:[#allocation0]]
  $region57: #{tpu_custom_call.1} parent=0
    _
  %s6 = ssub.s32 1, %s4
  %s7 = scalar_select 0, %s6, %s4
  $region1: #{tpu_custom_call.1} parent=0
    #allocation2 [shape = 'u8[8192]{0}', space=vmem, size = 0x2000, scoped, tag = 'input window, operand 0']
    #allocation3 [shape = 's32[2]{0}', space=sflag, size = 0x8, scoped, tag = 'scoped memory for tpu_custom_call.1']
    #allocation4 [shape = 's32[2]{0}', space=sflag, size = 0x8, scoped, tag = 'scoped memory for tpu_custom_call.1']
    #allocation5 [shape = 's32[2]{0}', space=sflag, size = 0x8, scoped, tag = 'scoped memory for tpu_custom_call.1']
    #allocation6 [shape = 's32[2]{0}', space=sflag, size = 0x8, scoped, tag = 'scoped memory for tpu_custom_call.1']
    #allocation7 [shape = 'u8[2048]{0}', space=smem, size = 0x800, scoped, tag = 'input window, operand 1, single buffered']
    #allocation8 [shape = 'u8[512]{0}', space=smem, size = 0x200, scoped, tag = 'input window, operand 2, single buffered']
    #allocation9 [shape = 'u8[8192]{0}', space=vmem, size = 0x2000, scoped, tag = 'output window, operand 0']
    %8 = vsyncpa [#allocation3], 0
    %s9 = scalar_lea.sflag [#allocation3], 1
    %10 = vsyncpa %s9, 0
    %11 = vsyncpa [#allocation5], 0
    %12 = vsyncpa [#allocation6], 0
    %13 = vsyncpa [#allocation4], 0
    %s14 = scalar_lea.sflag [#allocation4], 1
    %15 = vsyncpa %s14, 0
    loop: start=0, step=1, limit=4
    $region2: #{tpu_custom_call.1} parent=1 // loop_pre_header
      _
    $region3: #{tpu_custom_call.1} parent=1 // loop_header
      %s17 = sphi 0, %s21
      %p18 = scmp.ge.s32.totalorder %s17, 4
      %s24 = sphi 0, %s36
      %s25 = sphi 0, %s32
      %s26 = sphi 0, %s24
      %s27 = sphi 0, %s25
      %s28 = sphi 0, %s26
      %s29 = sphi 0, %s27
      %s41 = sphi 0, %s43
      %s44 = sphi 0, %s41
      %s45 = sphi 0, %s44
      %s61 = sphi 0, %s45
      %s65 = sphi 0, %s65
      %s67 = sphi 0, %s65
      %s68 = sphi 0, %s67
      %s82 = sphi 0, %s68
      %s86 = sphi 0, %s86
      %s88 = sphi 0, %s86
      %s89 = sphi 0, %s88
      %s103 = sphi 0, %s89
      %s111 = sphi 0, %s113
      %s114 = sphi 0, %s111
      %s115 = sphi 0, %s114
      %s131 = sphi 0, %s115
    $region4: #{tpu_custom_call.1} parent=1 // loop_header_branch
      %20 = sbr.rel (%p18) target = $region8
    $region5: #{tpu_custom_call.1} parent=1 // loop_body
      %s22 = ssub.s32 %s17, 1
      %s23 = ssub.s32 %s17, 2
      %s30 = sadd.s32 1, %s25
      %p31 = scmp.ge.s32.totalorder %s30, 1
      %s32 = scalar_select %p31, 0, %s30
      %s33 = sadd.s32 1, %s24
      %s34 = scalar_select %p31, %s33, %s24
      %p35 = scmp.ge.s32.totalorder %s34, 2
      %s36 = scalar_select %p35, 0, %s34
      %s37 = ssub.s32 %s24, %s36
      %s38 = ssub.s32 %s25, %s32
      %s39 = sor.u32 %s37, %s38
      %p40 = scmp.eq.s32.totalorder %s39, 0
      %s42 = sadd.s32 %s41, 1
      %s43 = scalar_select %p40, %s41, %s42
      %p46 = pneg %p40
      %p47 = scmp.eq.s32.totalorder %s17, 1
      %p48 = por %p46, %p47
      %p49 = scmp.ne.s32.totalorder %s41, %s44
      %p50 = scmp.eq.s32.totalorder %s17, 0
      %p51 = por %p49, %p50
      %p52 = scmp.ne.s32.totalorder %s41, %s44
      %p53 = scmp.eq.s32.totalorder %s22, 1
      %p54 = por %p52, %p53
      %p55 = scmp.ne.s32.totalorder %s44, %s45
      %p56 = scmp.eq.s32.totalorder %s22, 0
      %p57 = por %p55, %p56
      %p58 = scmp.ne.s32.totalorder %s44, %s45
      %p59 = scmp.eq.s32.totalorder %s23, 1
      %p60 = por %p58, %p59
      %p62 = scmp.ne.s32.totalorder %s45, %s61
      %p63 = scmp.eq.s32.totalorder %s23, 0
      %p64 = por %p62, %p63
      %s66 = sadd.s32 %s65, 1
      %p69 = scmp.eq.s32.totalorder %s17, 1
      %p70 = scmp.ne.s32.totalorder %s65, %s67
      %p71 = scmp.eq.s32.totalorder %s17, 0
      %p72 = por %p70, %p71
      %p73 = scmp.ne.s32.totalorder %s65, %s67
      %p74 = scmp.eq.s32.totalorder %s22, 1
      %p75 = por %p73, %p74
      %p76 = scmp.ne.s32.totalorder %s67, %s68
      %p77 = scmp.eq.s32.totalorder %s22, 0
      %p78 = por %p76, %p77
      %p79 = scmp.ne.s32.totalorder %s67, %s68
      %p80 = scmp.eq.s32.totalorder %s23, 1
      %p81 = por %p79, %p80
      %p83 = scmp.ne.s32.totalorder %s68, %s82
      %p84 = scmp.eq.s32.totalorder %s23, 0
      %p85 = por %p83, %p84
      %s87 = sadd.s32 %s86, 1
      %p90 = scmp.eq.s32.totalorder %s17, 1
      %p91 = scmp.ne.s32.totalorder %s86, %s88
      %p92 = scmp.eq.s32.totalorder %s17, 0
      %p93 = por %p91, %p92
      %p94 = scmp.ne.s32.totalorder %s86, %s88
      %p95 = scmp.eq.s32.totalorder %s22, 1
      %p96 = por %p94, %p95
      %p97 = scmp.ne.s32.totalorder %s88, %s89
      %p98 = scmp.eq.s32.totalorder %s22, 0
      %p99 = por %p97, %p98
      %p100 = scmp.ne.s32.totalorder %s88, %s89
      %p101 = scmp.eq.s32.totalorder %s23, 1
      %p102 = por %p100, %p101
      %p104 = scmp.ne.s32.totalorder %s89, %s103
      %p105 = scmp.eq.s32.totalorder %s23, 0
      %p106 = por %p104, %p105
      %s107 = ssub.s32 %s24, %s36
      %s108 = ssub.s32 %s25, %s32
      %s109 = sor.u32 %s107, %s108
      %p110 = scmp.eq.s32.totalorder %s109, 0
      %s112 = sadd.s32 %s111, 1
      %s113 = scalar_select %p110, %s111, %s112
      %p116 = pneg %p110
      %p117 = scmp.eq.s32.totalorder %s17, 1
      %p118 = por %p116, %p117
      %p119 = scmp.ne.s32.totalorder %s111, %s114
      %p120 = scmp.eq.s32.totalorder %s17, 0
      %p121 = por %p119, %p120
      %p122 = scmp.ne.s32.totalorder %s111, %s114
      %p123 = scmp.eq.s32.totalorder %s22, 1
      %p124 = por %p122, %p123
      %p125 = scmp.ne.s32.totalorder %s114, %s115
      %p126 = scmp.eq.s32.totalorder %s22, 0
      %p127 = por %p125, %p126
      %p128 = scmp.ne.s32.totalorder %s114, %s115
      %p129 = scmp.eq.s32.totalorder %s23, 1
      %p130 = por %p128, %p129
      %p132 = scmp.ne.s32.totalorder %s115, %s131
      %p133 = scmp.eq.s32.totalorder %s23, 0
      %p134 = por %p132, %p133
      %p135 = scmp.le.s32.totalorder 1, %s17
      %p136 = scmp.lt.s32.totalorder %s17, 3
      %p137 = pnand %p135, %p136
      %p138 = pneg %p137
      // Predicated region
      $region9: #{tpu_custom_call.1} parent=5 // pred_check
        _
      $region10: #{tpu_custom_call.1} parent=5 // pred_check_branch
        %140 = sbr.rel (%p137) target = $region12
      $region11: #{tpu_custom_call.1} parent=5 // pred_region
        %s141 = ssub.s32 %s17, 1
        // Predicated region
        $region13: #{tpu_custom_call.1} parent=11 // pred_check
          %p142 = pneg %p78
        $region14: #{tpu_custom_call.1} parent=11 // pred_check_branch
          %144 = sbr.rel (%p142) target = $region16
        $region15: #{tpu_custom_call.1} parent=11 // pred_region
          %s146 = ssub.s32 64, 64
          %147 = vsyncadd [#allocation5], %s146
          %150 = dma.hbm_to_smem %s1, 64, [#allocation7], [#allocation5]
        $region16: #{tpu_custom_call.1} parent=11 // pred_fallthru
          _
        // Predicated region
        $region17: #{tpu_custom_call.1} parent=11 // pred_check
          %p151 = pneg %p99
        $region18: #{tpu_custom_call.1} parent=11 // pred_check_branch
          %153 = sbr.rel (%p151) target = $region20
        $region19: #{tpu_custom_call.1} parent=11 // pred_region
          %s155 = ssub.s32 16, 16
          %156 = vsyncadd [#allocation6], %s155
          %s158 = sshll.u32 %s2, 4
          %s159 = int_to_ptr.vmem [resolvable:$true] %s158
          %161 = dma.vmem_to_smem %s159, 16, [#allocation8], [#allocation6]
        $region20: #{tpu_custom_call.1} parent=11 // pred_fallthru
          _
      $region12: #{tpu_custom_call.1} parent=5 // pred_fallthru
        _
      %p162 = scmp.lt.s32.totalorder %s17, 2
      // Predicated region
      $region21: #{tpu_custom_call.1} parent=5 // pred_check
        %p163 = pneg %p162
      $region22: #{tpu_custom_call.1} parent=5 // pred_check_branch
        %165 = sbr.rel (%p163) target = $region24
      $region23: #{tpu_custom_call.1} parent=5 // pred_region
        // Predicated region
        $region25: #{tpu_custom_call.1} parent=23 // pred_check
          %p166 = pneg %p51
        $region26: #{tpu_custom_call.1} parent=23 // pred_check_branch
          %168 = sbr.rel (%p166) target = $region28
        $region27: #{tpu_custom_call.1} parent=23 // pred_region
          %s169 = sand.u32 %s41, 1
          %s170 = scalar_lea.sflag [#allocation3], %s169
          %s171 = sand.u32 %s41, 1
          %s172 = smul.addr %s171, 8
          %s173 = scalar_lea.vmem [#allocation2], %s172
          %s175 = ssub.s32 128, 128
          %176 = vsyncadd %s170, %s175
          %s177 = smul.addr %s24, 4
          %s178 = sadd.s32 %s25, %s177
          %s179 = smul.addr %s178, 32
          %s180 = scalar_lea.hbm %s0, %s179
          %s181 = sshll.u32 %s173, 4
          %s182 = int_to_ptr.vmem [resolvable:$true] %s181
          %187 = dma.hbm_to_vmem [thread:$0]  %s180, 128, %s182, %s170, 32, 32, 2
        $region28: #{tpu_custom_call.1} parent=23 // pred_fallthru
          _
      $region24: #{tpu_custom_call.1} parent=5 // pred_fallthru
        _
      %p188 = scmp.le.s32.totalorder 1, %s17
      %p189 = scmp.lt.s32.totalorder %s17, 3
      %p190 = pnand %p188, %p189
      %p191 = pneg %p190
      // Predicated region
      $region29: #{tpu_custom_call.1} parent=5 // pred_check
        _
      $region30: #{tpu_custom_call.1} parent=5 // pred_check_branch
        %193 = sbr.rel (%p190) target = $region32
      $region31: #{tpu_custom_call.1} parent=5 // pred_region
        %s194 = ssub.s32 %s17, 1
        %s195 = sand.u32 %s44, 1
        %s196 = scalar_lea.sflag [#allocation3], %s195
        %s197 = sand.u32 %s44, 1
        %s198 = smul.addr %s197, 8
        %s199 = scalar_lea.vmem [#allocation2], %s198
        // Predicated region
        $region33: #{tpu_custom_call.1} parent=31 // pred_check
          %p200 = pneg %p57
        $region34: #{tpu_custom_call.1} parent=31 // pred_check_branch
          %202 = sbr.rel (%p200) target = $region36
        $region35: #{tpu_custom_call.1} parent=31 // pred_region
          %203 = dma.done %s196, 128
        $region36: #{tpu_custom_call.1} parent=31 // pred_fallthru
          _
        // Predicated region
        $region37: #{tpu_custom_call.1} parent=31 // pred_check
          %p204 = pneg %p78
        $region38: #{tpu_custom_call.1} parent=31 // pred_check_branch
          %206 = sbr.rel (%p204) target = $region40
        $region39: #{tpu_custom_call.1} parent=31 // pred_region
          %207 = dma.done [#allocation5], 64
        $region40: #{tpu_custom_call.1} parent=31 // pred_fallthru
          _
        // Predicated region
        $region41: #{tpu_custom_call.1} parent=31 // pred_check
          %p208 = pneg %p99
        $region42: #{tpu_custom_call.1} parent=31 // pred_check_branch
          %210 = sbr.rel (%p208) target = $region44
        $region43: #{tpu_custom_call.1} parent=31 // pred_region
          %211 = dma.done [#allocation6], 16
        $region44: #{tpu_custom_call.1} parent=31 // pred_fallthru
          _
        %212 = sfence
        %s213 = sand.u32 %s44, 1
        %s214 = scalar_lea.sflag [#allocation3], %s213
        %s215 = sand.u32 %s44, 1
        %s216 = smul.addr %s215, 8
        %s217 = scalar_lea.vmem [#allocation2], %s216
        %p218 = pneg %p57
        %p219 = pneg %p54
        %p220 = pneg %p78
        %p221 = pneg %p75
        %p222 = pneg %p99
        %p223 = pneg %p96
        %p224 = pneg %p127
        %p225 = pneg %p124
        %s226 = sand.u32 %s114, 1
        %s227 = scalar_lea.sflag [#allocation4], %s226
        %s228 = sand.u32 %s114, 1
        %s229 = smul.addr %s228, 8
        %s230 = scalar_lea.vmem [#allocation9], %s229
        %v231 = vld [vmem:[%s199] sm:$0x3]
        %v232 = vld [vmem:[%s199 + $0x2] sm:$0x3]
        %v233 = vld [vmem:[%s199 + $0x4] sm:$0x3]
        %v234 = vld [vmem:[%s199 + $0x6] sm:$0x3]
        %s235 = sld [smem:[#allocation8]]
        %v236 = vstv %s235
        %v237 = vadd.f32 %v231, %v236
        %s238 = sld [smem:[#allocation7]]
        %v239 = vstv %s238
        %v240 = vmul.f32 %v239, %v231
        %v241 = vadd.f32 %v237, %v240
        %s242 = sld [smem:[#allocation7 + $0x1]]
        %v243 = vstv %s242
        %v244 = vmul.f32 %v243, %v232
        %v245 = vadd.f32 %v241, %v244
        %s246 = sld [smem:[#allocation7 + $0x2]]
        %v247 = vstv %s246
        %v248 = vmul.f32 %v247, %v233
        %v249 = vadd.f32 %v245, %v248
        %s250 = sld [smem:[#allocation7 + $0x3]]
        %v251 = vstv %s250
        %v252 = vmul.f32 %v251, %v234
        %v253 = vadd.f32 %v249, %v252
        %s254 = sld [smem:[#allocation8 + $0x1]]
        %v255 = vstv %s254
        %v256 = vadd.f32 %v232, %v255
        %s257 = sld [smem:[#allocation7 + $0x80]]
        %v258 = vstv %s257
        %v259 = vmul.f32 %v258, %v231
        %v260 = vadd.f32 %v256, %v259
        %s261 = sld [smem:[#allocation7 + $0x81]]
        %v262 = vstv %s261
        %v263 = vmul.f32 %v262, %v232
        %v264 = vadd.f32 %v260, %v263
        %s265 = sld [smem:[#allocation7 + $0x82]]
        %v266 = vstv %s265
        %v267 = vmul.f32 %v266, %v233
        %v268 = vadd.f32 %v264, %v267
        %s269 = sld [smem:[#allocation7 + $0x83]]
        %v270 = vstv %s269
        %v271 = vmul.f32 %v270, %v234
        %v272 = vadd.f32 %v268, %v271
        %s273 = sld [smem:[#allocation8 + $0x2]]
        %v274 = vstv %s273
        %v275 = vadd.f32 %v233, %v274
        %s276 = sld [smem:[#allocation7 + $0x100]]
        %v277 = vstv %s276
        %v278 = vmul.f32 %v277, %v231
        %v279 = vadd.f32 %v275, %v278
        %s280 = sld [smem:[#allocation7 + $0x101]]
        %v281 = vstv %s280
        %v282 = vmul.f32 %v281, %v232
        %v283 = vadd.f32 %v279, %v282
        %s284 = sld [smem:[#allocation7 + $0x102]]
        %v285 = vstv %s284
        %v286 = vmul.f32 %v285, %v233
        %v287 = vadd.f32 %v283, %v286
        %s288 = sld [smem:[#allocation7 + $0x103]]
        %v289 = vstv %s288
        %v290 = vmul.f32 %v289, %v234
        %v291 = vadd.f32 %v287, %v290
        %s292 = sld [smem:[#allocation8 + $0x3]]
        %v293 = vstv %s292
        %v294 = vadd.f32 %v234, %v293
        %s295 = sld [smem:[#allocation7 + $0x180]]
        %v296 = vstv %s295
        %v297 = vmul.f32 %v296, %v231
        %v298 = vadd.f32 %v294, %v297
        %s299 = sld [smem:[#allocation7 + $0x181]]
        %v300 = vstv %s299
        %v301 = vmul.f32 %v300, %v232
        %v302 = vadd.f32 %v298, %v301
        %s303 = sld [smem:[#allocation7 + $0x182]]
        %v304 = vstv %s303
        %v305 = vmul.f32 %v304, %v233
        %v306 = vadd.f32 %v302, %v305
        %s307 = sld [smem:[#allocation7 + $0x183]]
        %v308 = vstv %s307
        %v309 = vmul.f32 %v308, %v234
        %v310 = vadd.f32 %v306, %v309
        %311 = vst [vmem:[%s230] sm:$0x3] %v253
        %312 = vst [vmem:[%s230 + $0x2] sm:$0x3] %v272
        %313 = vst [vmem:[%s230 + $0x4] sm:$0x3] %v291
        %314 = vst [vmem:[%s230 + $0x6] sm:$0x3] %v310
        %s315 = sand.u32 %s114, 1
        %s316 = scalar_lea.sflag [#allocation4], %s315
        %s317 = sand.u32 %s114, 1
        %s318 = smul.addr %s317, 8
        %s319 = scalar_lea.vmem [#allocation9], %s318
        // Predicated region
        $region45: #{tpu_custom_call.1} parent=31 // pred_check
          %p320 = pneg %p124
        $region46: #{tpu_custom_call.1} parent=31 // pred_check_branch
          %322 = sbr.rel (%p320) target = $region48
        $region47: #{tpu_custom_call.1} parent=31 // pred_region
          %s324 = ssub.s32 128, 128
          %325 = vsyncadd %s316, %s324
          %s326 = smul.addr %s26, 4
          %s327 = sadd.s32 %s27, %s326
          %s328 = smul.addr %s327, 32
          %s329 = scalar_lea.hbm %s3, %s328
          %s330 = sshll.u32 %s319, 4
          %s331 = int_to_ptr.vmem [resolvable:$true] %s330
          %336 = dma.vmem_to_hbm [thread:$0]  %s331, 128, %s329, %s316, 32, 32, 2
        $region48: #{tpu_custom_call.1} parent=31 // pred_fallthru
          _
      $region32: #{tpu_custom_call.1} parent=5 // pred_fallthru
        _
      %p337 = scmp.le.s32.totalorder 2, %s17
      // Predicated region
      $region49: #{tpu_custom_call.1} parent=5 // pred_check
        %p338 = pneg %p337
      $region50: #{tpu_custom_call.1} parent=5 // pred_check_branch
        %340 = sbr.rel (%p338) target = $region52
      $region51: #{tpu_custom_call.1} parent=5 // pred_region
        %s341 = ssub.s32 %s17, 2
        // Predicated region
        $region53: #{tpu_custom_call.1} parent=51 // pred_check
          %p342 = pneg %p130
        $region54: #{tpu_custom_call.1} parent=51 // pred_check_branch
          %344 = sbr.rel (%p342) target = $region56
        $region55: #{tpu_custom_call.1} parent=51 // pred_region
          %s345 = sand.u32 %s115, 1
          %s346 = scalar_lea.sflag [#allocation4], %s345
          %s347 = sand.u32 %s115, 1
          %s348 = smul.addr %s347, 8
          %s349 = scalar_lea.vmem [#allocation9], %s348
          %350 = dma.done %s346, 128
        $region56: #{tpu_custom_call.1} parent=51 // pred_fallthru
          _
      $region52: #{tpu_custom_call.1} parent=5 // pred_fallthru
        _
    $region6: #{tpu_custom_call.1} parent=1 // loop_footer
      %s21 = sadd.s32 1, %s17
    $region7: #{tpu_custom_call.1} parent=1 // loop_footer_branch
      %16 = sbr.rel target = $region3
    $region8: #{tpu_custom_call.1} parent=1 // loop_exit
      _
    %351 = vsyncpa [#allocation3], 1
    %s352 = scalar_lea.sflag [#allocation3], 1
    %353 = vsyncpa %s352, 1
    %354 = vsyncpa [#allocation4], 1
    %s355 = scalar_lea.sflag [#allocation4], 1
    %356 = vsyncpa %s355, 1
    %357 = vsyncpa [#allocation5], 1
    %s358 = scalar_lea.sflag [#allocation5], 1
    %359 = vsyncpa %s358, 1
    %360 = vsyncpa [#allocation6], 1
    %s361 = scalar_lea.sflag [#allocation6], 1
    %362 = vsyncpa %s361, 1

</llo_original>
